<compile_context>
chip_gen: v6e
topology: v6e:2x2x1
jax: 0.10.0
libtpu: 0.0.40
codegen_flags: <defaults>
</compile_context>

<pallas_src>
import numpy as np
import jax
import jax.numpy as jnp
from jax.experimental import pallas as pl
from jax.experimental.pallas import tpu as pltpu


# ----------------------------------------------------------------------------
# Matrix builders (glue, plain numpy)
# ----------------------------------------------------------------------------
def adaptive_pool_matrix(in_size, out_size):
    """P[i, h] = 1/len_i if h in adaptive-pool window i else 0."""
    P = np.zeros((out_size, in_size), np.float32)
    for i in range(out_size):
        s = (i * in_size) // out_size
        e = -(-((i + 1) * in_size) // out_size)  # ceil
        P[i, s:e] = 1.0 / (e - s)
    return P


def bilinear_matrix(out_size, in_size):
    """L[h, i] = bilinear (align_corners=True) weight of input row i for output row h."""
    L = np.zeros((out_size, in_size), np.float32)
    if in_size == 1:
        L[:, 0] = 1.0
        return L
    for h in range(out_size):
        src = h * (in_size - 1) / (out_size - 1)
        i0 = min(int(np.floor(src)), in_size - 1)
        i1 = min(i0 + 1, in_size - 1)
        f = src - i0
        L[h, i0] += 1.0 - f
        L[h, i1] += f
    return L


def build_cat_matrices(H, W, bins, R):
    """Concatenated pooling / upsample matrices (lane-padded to 128) + block mask."""
    HW = H * W
    sizes = [b * b for b in bins]
    offs = np.cumsum([0] + sizes)
    BBtot = int(offs[-1])                       # 1+4+9+36 = 50 for bins (1,2,3,6)
    BBp = max(128, -(-BBtot // 128) * 128)      # pad to lane multiple -> 128
    nb = len(bins)
    poolT = np.zeros((HW, BBp), np.float32)     # Y @ poolT -> pooled (all bins)
    upmat = np.zeros((BBp, HW), np.float32)     # z @ upmat -> upsampled (all bins)
    mask = np.zeros((nb * R, BBp), np.float32)  # 1 on each row-group's own bin block
    for bi, b in enumerate(bins):
        o, bb = int(offs[bi]), b * b
        Ph = adaptive_pool_matrix(H, b)                             # (b, H)
        Pw = adaptive_pool_matrix(W, b)                             # (b, W)
        K = np.einsum('ih,jw->ijhw', Ph, Pw).reshape(bb, HW)
        poolT[:, o:o + bb] = K.T
        Lh = bilinear_matrix(H, b)                                  # (H, b)
        Lw = bilinear_matrix(W, b)                                  # (W, b)
        U = np.einsum('hi,wj->ijhw', Lh, Lw).reshape(bb, HW)
        upmat[o:o + bb, :] = U
        mask[bi * R:(bi + 1) * R, o:o + bb] = 1.0
    return jnp.asarray(poolT), jnp.asarray(upmat), mask, BBp


# ----------------------------------------------------------------------------
# Pallas kernel: whole batch + all bins fused in a single grid step
# ----------------------------------------------------------------------------
def ppm_kernel(x_ref, w_ref, poolT_ref, up_ref, bias_ref, o_ref):
    Nb, C, HW = x_ref.shape
    nbR = w_ref.shape[0]
    w = w_ref[...]
    ys = []
    for n in range(Nb):                          # static, tiny trip count
        xn = x_ref[n]                                                # (C, HW)
        o_ref[n, :C, :] = xn.astype(o_ref.dtype)                     # passthrough rows
        ys.append(jnp.dot(w, xn, preferred_element_type=jnp.float32))  # 1x1 conv (BN scale folded)
    y = jnp.concatenate(ys, axis=0)                                  # (Nb*nbR, HW)
    # adaptive average pooling for all bins / batch elements at once
    pooled = jnp.dot(y, poolT_ref[...], preferred_element_type=jnp.float32)   # (Nb*nbR, BBp)
    # BN bias + ReLU; bias is -1e30 on cross-bin / padded columns -> ReLU zeroes them
    z = jnp.maximum(pooled + bias_ref[...], 0.0)
    # bilinear upsample (align_corners=True) for all bins at once
    up = jnp.dot(z, up_ref[...], preferred_element_type=jnp.float32)          # (Nb*nbR, HW)
    for n in range(Nb):
        o_ref[n, C:, :] = up[n * nbR:(n + 1) * nbR, :].astype(o_ref.dtype)


def ppm_forward(x, W_cat, poolT_cat, up_cat, bias_bcast):
    N, C, H, W = x.shape
    HW = H * W
    nbR = W_cat.shape[0]
    BBp = poolT_cat.shape[1]
    x_flat = x.reshape(N, C, HW)

    out = pl.pallas_call(
        ppm_kernel,
        out_shape=jax.ShapeDtypeStruct((N, C + nbR, HW), x.dtype),
        grid=(1,),                               # single step: whole batch in VMEM (~0.4 MiB)
        in_specs=[
            pl.BlockSpec((N, C, HW), lambda i: (0, 0, 0)),      # x, full batch
            pl.BlockSpec((nbR, C), lambda i: (0, 0)),           # stacked scaled conv weights
            pl.BlockSpec((HW, BBp), lambda i: (0, 0)),          # concatenated pool matrix
            pl.BlockSpec((BBp, HW), lambda i: (0, 0)),          # concatenated upsample matrix
            pl.BlockSpec((N * nbR, BBp), lambda i: (0, 0)),     # masked BN bias
        ],
        out_specs=pl.BlockSpec((N, C + nbR, HW), lambda i: (0, 0, 0)),
        compiler_params=pltpu.CompilerParams(
            dimension_semantics=("arbitrary",)),
    )(x_flat, W_cat, poolT_cat, up_cat, bias_bcast)

    return out.reshape(N, C + nbR, H, W)


# ----------------------------------------------------------------------------
# Pure numpy reference (for validation) — follows the torch module literally
# ----------------------------------------------------------------------------
def ppm_reference(x, w_all, scale_all, bias_all, bins):
    xn = np.asarray(x)
    N, C, H, W = xn.shape
    outs = [xn]
    for bi, b in enumerate(bins):
        pooled = np.zeros((N, C, b, b), np.float32)
        for i in range(b):
            hs, he = (i * H) // b, -(-((i + 1) * H) // b)
            for j in range(b):
                ws, we = (j * W) // b, -(-((j + 1) * W) // b)
                pooled[:, :, i, j] = xn[:, :, hs:he, ws:we].mean(axis=(2, 3))
        z = np.einsum('rc,ncij->nrij', np.asarray(w_all[bi]), pooled)
        z = np.maximum(z * np.asarray(scale_all[bi]).reshape(1, -1, 1, 1)
                       + np.asarray(bias_all[bi]).reshape(1, -1, 1, 1), 0.0)
        Lh = bilinear_matrix(H, b)
        Lw = bilinear_matrix(W, b)
        outs.append(np.einsum('hi,nrij,wj->nrhw', Lh, z, Lw))
    return np.concatenate(outs, axis=1)


# ----------------------------------------------------------------------------
if __name__ == "__main__":
    # BasicModule(in_dim=32, ratio=8) -> PPM(32, 4, bins=(1, 2, 3, 6))
    N, C, H, W = 2, 32, 16, 16
    ratio = 8
    R = C // ratio
    bins = (1, 2, 3, 6)
    nb = len(bins)
    eps = 1e-5

    key = jax.random.PRNGKey(0)
    kx, kw, kg, kb = jax.random.split(key, 4)

    x = jax.random.normal(kx, (N, C, H, W), dtype=jnp.float32)

    # Deterministic synthetic parameters (one Conv2d 1x1 + BatchNorm2d per bin)
    w_all = jax.random.normal(kw, (nb, R, C), dtype=jnp.float32) * 0.1
    gamma = jax.random.uniform(kg, (nb, R), minval=0.5, maxval=1.5)
    beta = jax.random.normal(kb, (nb, R), dtype=jnp.float32) * 0.1
    running_mean = jnp.zeros((nb, R), jnp.float32)
    running_var = jnp.ones((nb, R), jnp.float32)

    # eval-mode BN -> per-channel scale / bias
    scale = gamma / jnp.sqrt(running_var + eps)          # (nb, R)
    bias = beta - running_mean * scale                   # (nb, R)

    # Fold the BN scale into the conv weights and stack all bins' convs.
    W_cat = (w_all * scale[:, :, None]).reshape(nb * R, C)      # (16, 32)

    poolT_cat, up_cat, mask_np, BBp = build_cat_matrices(H, W, bins, R)

    # Fold the block mask into the bias: -1e30 (finite!) off-bin -> ReLU zeroes.
    bias_col = np.asarray(bias).reshape(nb * R, 1).astype(np.float32)
    bias_masked = np.where(mask_np > 0, bias_col, np.float32(-1e30)).astype(np.float32)
    bias_bcast = jnp.asarray(np.tile(bias_masked, (N, 1)))       # (N*nbR, BBp)

    out = jax.jit(ppm_forward)(x, W_cat, poolT_cat, up_cat, bias_bcast)
    out = jax.block_until_ready(out)

    assert out.shape == (N, C + nb * R, H, W), out.shape

    ref = ppm_reference(x, w_all, scale, bias, bins)
    np.testing.assert_allclose(np.asarray(out), ref, rtol=1e-4, atol=1e-4)

    print("KERNEL_OK")
</pallas_src>

<mosaic_0001>
module attributes {stable_mosaic.version = 11 : i64} {
  func.func @ppm_kernel(%arg0: i32, %arg1: memref<2x32x256xf32, #tpu.memory_space<vmem>>, %arg2: memref<16x32xf32, #tpu.memory_space<vmem>>, %arg3: memref<256x128xf32, #tpu.memory_space<vmem>>, %arg4: memref<128x256xf32, #tpu.memory_space<vmem>>, %arg5: memref<32x128xf32, #tpu.memory_space<vmem>>, %arg6: memref<2x48x256xf32, #tpu.memory_space<vmem>>) attributes {dimension_semantics = [#tpu.dimension_semantics<arbitrary>], iteration_bounds = array<i64: 1>, scalar_prefetch = 0 : i64, scratch_operands = 0 : i64, tpu.core_type = #tpu.core_type<tc>, window_params = [{pipeline_mode = #tpu.pipeline_mode<synchronous>, transform_indices = @transform_0, window_bounds = array<i64: 2, 32, 256>}, {pipeline_mode = #tpu.pipeline_mode<synchronous>, transform_indices = @transform_1, window_bounds = array<i64: 16, 32>}, {pipeline_mode = #tpu.pipeline_mode<synchronous>, transform_indices = @transform_2, window_bounds = array<i64: 256, 128>}, {pipeline_mode = #tpu.pipeline_mode<synchronous>, transform_indices = @transform_3, window_bounds = array<i64: 128, 256>}, {pipeline_mode = #tpu.pipeline_mode<synchronous>, transform_indices = @transform_4, window_bounds = array<i64: 32, 128>}, {pipeline_mode = #tpu.pipeline_mode<synchronous>, transform_indices = @transform_5, window_bounds = array<i64: 2, 48, 256>}]} {
    %c0 = arith.constant 0 : index
    %c0_0 = arith.constant 0 : index
    %0 = vector.load %arg2[%c0, %c0_0] : memref<16x32xf32, #tpu.memory_space<vmem>>, vector<16x32xf32>
    %c0_1 = arith.constant 0 : index
    %c0_2 = arith.constant 0 : index
    %c0_3 = arith.constant 0 : index
    %1 = vector.load %arg1[%c0_1, %c0_2, %c0_3] : memref<2x32x256xf32, #tpu.memory_space<vmem>>, vector<1x32x256xf32>
    %2 = vector.shape_cast %1 : vector<1x32x256xf32> to vector<32x256xf32>
    %c0_4 = arith.constant 0 : index
    %c0_5 = arith.constant 0 : index
    %c0_6 = arith.constant 0 : index
    %3 = vector.load %arg6[%c0_4, %c0_5, %c0_6] : memref<2x48x256xf32, #tpu.memory_space<vmem>>, vector<1x32x256xf32>
    %4 = vector.shape_cast %3 : vector<1x32x256xf32> to vector<32x256xf32>
    %5 = vector.shape_cast %2 : vector<32x256xf32> to vector<1x32x256xf32>
    tpu.vector_store %arg6[%c0_4, %c0_5, %c0_6], %5 {strides = array<i32>} : memref<2x48x256xf32, #tpu.memory_space<vmem>>, vector<1x32x256xf32>,
    %cst = arith.constant dense<0.000000e+00> : vector<16x256xf32>
    %6 = tpu.matmul %0, %2, %cst {dimension_numbers = #tpu.dot_dimension_numbers<[1], [0], [0], [1], [0, 0, 1, 1], [], []>} : vector<16x32xf32>, vector<32x256xf32>, vector<16x256xf32> -> vector<16x256xf32>
    %c1 = arith.constant 1 : index
    %c0_7 = arith.constant 0 : index
    %c0_8 = arith.constant 0 : index
    %7 = vector.load %arg1[%c1, %c0_7, %c0_8] : memref<2x32x256xf32, #tpu.memory_space<vmem>>, vector<1x32x256xf32>
    %8 = vector.shape_cast %7 : vector<1x32x256xf32> to vector<32x256xf32>
    %c1_9 = arith.constant 1 : index
    %c0_10 = arith.constant 0 : index
    %c0_11 = arith.constant 0 : index
    %9 = vector.load %arg6[%c1_9, %c0_10, %c0_11] : memref<2x48x256xf32, #tpu.memory_space<vmem>>, vector<1x32x256xf32>
    %10 = vector.shape_cast %9 : vector<1x32x256xf32> to vector<32x256xf32>
    %11 = vector.shape_cast %8 : vector<32x256xf32> to vector<1x32x256xf32>
    tpu.vector_store %arg6[%c1_9, %c0_10, %c0_11], %11 {strides = array<i32>} : memref<2x48x256xf32, #tpu.memory_space<vmem>>, vector<1x32x256xf32>,
    %cst_12 = arith.constant dense<0.000000e+00> : vector<16x256xf32>
    %12 = tpu.matmul %0, %8, %cst_12 {dimension_numbers = #tpu.dot_dimension_numbers<[1], [0], [0], [1], [0, 0, 1, 1], [], []>} : vector<16x32xf32>, vector<32x256xf32>, vector<16x256xf32> -> vector<16x256xf32>
    %13 = tpu.concatenate %6, %12 in 0 : vector<16x256xf32>, vector<16x256xf32> -> vector<32x256xf32>
    %c0_13 = arith.constant 0 : index
    %c0_14 = arith.constant 0 : index
    %14 = vector.load %arg3[%c0_13, %c0_14] : memref<256x128xf32, #tpu.memory_space<vmem>>, vector<256x128xf32>
    %cst_15 = arith.constant dense<0.000000e+00> : vector<32x128xf32>
    %15 = tpu.matmul %13, %14, %cst_15 {dimension_numbers = #tpu.dot_dimension_numbers<[1], [0], [0], [1], [0, 0, 1, 1], [], []>} : vector<32x256xf32>, vector<256x128xf32>, vector<32x128xf32> -> vector<32x128xf32>
    %c0_16 = arith.constant 0 : index
    %c0_17 = arith.constant 0 : index
    %16 = vector.load %arg5[%c0_16, %c0_17] : memref<32x128xf32, #tpu.memory_space<vmem>>, vector<32x128xf32>
    %17 = arith.addf %15, %16 : vector<32x128xf32>
    %cst_18 = arith.constant 0.000000e+00 : f32
    %18 = vector.broadcast %cst_18 : f32 to vector<32x128xf32>
    %19 = arith.maximumf %17, %18 : vector<32x128xf32>
    %c0_19 = arith.constant 0 : index
    %c0_20 = arith.constant 0 : index
    %20 = vector.load %arg4[%c0_19, %c0_20] : memref<128x256xf32, #tpu.memory_space<vmem>>, vector<128x256xf32>
    %cst_21 = arith.constant dense<0.000000e+00> : vector<32x256xf32>
    %21 = tpu.matmul %19, %20, %cst_21 {dimension_numbers = #tpu.dot_dimension_numbers<[1], [0], [0], [1], [0, 0, 1, 1], [], []>} : vector<32x128xf32>, vector<128x256xf32>, vector<32x256xf32> -> vector<32x256xf32>
    %22 = vector.extract_strided_slice %21 {offsets = [0, 0], sizes = [16, 256], strides = [1, 1]} : vector<32x256xf32> to vector<16x256xf32>
    %c0_22 = arith.constant 0 : index
    %c32 = arith.constant 32 : index
    %c0_23 = arith.constant 0 : index
    %23 = vector.load %arg6[%c0_22, %c32, %c0_23] : memref<2x48x256xf32, #tpu.memory_space<vmem>>, vector<1x16x256xf32>
    %24 = vector.shape_cast %23 : vector<1x16x256xf32> to vector<16x256xf32>
    %25 = vector.shape_cast %22 : vector<16x256xf32> to vector<1x16x256xf32>
    tpu.vector_store %arg6[%c0_22, %c32, %c0_23], %25 {strides = array<i32>} : memref<2x48x256xf32, #tpu.memory_space<vmem>>, vector<1x16x256xf32>,
    %26 = vector.extract_strided_slice %21 {offsets = [16, 0], sizes = [16, 256], strides = [1, 1]} : vector<32x256xf32> to vector<16x256xf32>
    %c1_24 = arith.constant 1 : index
    %c32_25 = arith.constant 32 : index
    %c0_26 = arith.constant 0 : index
    %27 = vector.load %arg6[%c1_24, %c32_25, %c0_26] : memref<2x48x256xf32, #tpu.memory_space<vmem>>, vector<1x16x256xf32>
    %28 = vector.shape_cast %27 : vector<1x16x256xf32> to vector<16x256xf32>
    %29 = vector.shape_cast %26 : vector<16x256xf32> to vector<1x16x256xf32>
    tpu.vector_store %arg6[%c1_24, %c32_25, %c0_26], %29 {strides = array<i32>} : memref<2x48x256xf32, #tpu.memory_space<vmem>>, vector<1x16x256xf32>,
    return
  }
  func.func @transform_0(%arg0: i32) -> (i32, i32, i32) {
    %c0_i32 = arith.constant 0 : i32
    %c0_i32_0 = arith.constant 0 : i32
    %c0_i32_1 = arith.constant 0 : i32
    %c0_i32_2 = arith.constant 0 : i32
    return %c0_i32, %c0_i32_0, %c0_i32_1 : i32, i32, i32
  }
  func.func @transform_1(%arg0: i32) -> (i32, i32) {
    %c0_i32 = arith.constant 0 : i32
    %c0_i32_0 = arith.constant 0 : i32
    %c0_i32_1 = arith.constant 0 : i32
    return %c0_i32, %c0_i32_0 : i32, i32
  }
  func.func @transform_2(%arg0: i32) -> (i32, i32) {
    %c0_i32 = arith.constant 0 : i32
    %c0_i32_0 = arith.constant 0 : i32
    %c0_i32_1 = arith.constant 0 : i32
    return %c0_i32, %c0_i32_0 : i32, i32
  }
  func.func @transform_3(%arg0: i32) -> (i32, i32) {
    %c0_i32 = arith.constant 0 : i32
    %c0_i32_0 = arith.constant 0 : i32
    %c0_i32_1 = arith.constant 0 : i32
    return %c0_i32, %c0_i32_0 : i32, i32
  }
  func.func @transform_4(%arg0: i32) -> (i32, i32) {
    %c0_i32 = arith.constant 0 : i32
    %c0_i32_0 = arith.constant 0 : i32
    %c0_i32_1 = arith.constant 0 : i32
    return %c0_i32, %c0_i32_0 : i32, i32
  }
  func.func @transform_5(%arg0: i32) -> (i32, i32, i32) {
    %c0_i32 = arith.constant 0 : i32
    %c0_i32_0 = arith.constant 0 : i32
    %c0_i32_1 = arith.constant 0 : i32
    %c0_i32_2 = arith.constant 0 : i32
    return %c0_i32, %c0_i32_0, %c0_i32_1 : i32, i32, i32
  }
}

</mosaic_0001>

<llo_original>
// kernel: ppm_forward.1
$region0: #{ppm_forward.1}
  #allocation0 [shape = 'u32[]', space=smem, size = 0x4, offset = 0x4, fixed_abs, tag = 'smem constant byte address 0x4 - core index']
  #allocation1 [shape = 'u32[144,128]{1,0:T(1,128)}', space=vmem, size = 0x12000, scoped, tag = 'internal scratch']
  %s0 = inlined_call_operand.vmem [shape: f32[2,32,256], index: 0, kind: input, shape index: {}]
  %s1 = inlined_call_operand.vmem [shape: f32[16,32], index: 1, kind: input, shape index: {}]
  %s2 = inlined_call_operand.vmem [shape: f32[256,128], index: 2, kind: input, shape index: {}]
  %s3 = inlined_call_operand.vmem [shape: f32[128,256], index: 3, kind: input, shape index: {}]
  %s4 = inlined_call_operand.vmem [shape: f32[32,128], index: 4, kind: input, shape index: {}]
  %s5 = inlined_call_operand.vmem [shape: f32[2,48,256], index: 5, kind: output, shape index: {}]
  %s6 = sld [smem:[#allocation0]]
  $region30: #{ppm_forward.1} parent=0
    _
  %s8 = ssub.s32 1, %s6
  %s9 = scalar_select 0, %s8, %s6
  // Predicated region
  $region2: #{ppm_forward.1} parent=0 // pred_check
    _
  $region3: #{ppm_forward.1} parent=0 // pred_check_branch
    %11 = sbr.rel (0) target = $region5
  $region4: #{ppm_forward.1} parent=0 // pred_region
    _
  $region5: #{ppm_forward.1} parent=0 // pred_fallthru
    _
  // Predicated region
  $region6: #{ppm_forward.1} parent=0 // pred_check
    _
  $region7: #{ppm_forward.1} parent=0 // pred_check_branch
    %13 = sbr.rel (0) target = $region9
  $region8: #{ppm_forward.1} parent=0 // pred_region
    _
  $region9: #{ppm_forward.1} parent=0 // pred_fallthru
    _
  // Predicated region
  $region10: #{ppm_forward.1} parent=0 // pred_check
    _
  $region11: #{ppm_forward.1} parent=0 // pred_check_branch
    %15 = sbr.rel (0) target = $region13
  $region12: #{ppm_forward.1} parent=0 // pred_region
    _
  $region13: #{ppm_forward.1} parent=0 // pred_fallthru
    _
  // Predicated region
  $region14: #{ppm_forward.1} parent=0 // pred_check
    _
  $region15: #{ppm_forward.1} parent=0 // pred_check_branch
    %17 = sbr.rel (0) target = $region17
  $region16: #{ppm_forward.1} parent=0 // pred_region
    _
  $region17: #{ppm_forward.1} parent=0 // pred_fallthru
    _
  // Predicated region
  $region18: #{ppm_forward.1} parent=0 // pred_check
    _
  $region19: #{ppm_forward.1} parent=0 // pred_check_branch
    %19 = sbr.rel (0) target = $region21
  $region20: #{ppm_forward.1} parent=0 // pred_region
    _
  $region21: #{ppm_forward.1} parent=0 // pred_fallthru
    _
  %v20 = vld [vmem:[%s1] sm:$0xff]
  %v21 = vld [vmem:[%s1 + $0x8] sm:$0xff]
  %v22 = vld [vmem:[%s0] sm:$0xff]
  %v23 = vld [vmem:[%s0 + $0x8] sm:$0xff]
  %v24 = vld [vmem:[%s0 + $0x10] sm:$0xff]
  %v25 = vld [vmem:[%s0 + $0x18] sm:$0xff]
  %v26 = vld [vmem:[%s0 + $0x20] sm:$0xff]
  %v27 = vld [vmem:[%s0 + $0x28] sm:$0xff]
  %v28 = vld [vmem:[%s0 + $0x30] sm:$0xff]
  %v29 = vld [vmem:[%s0 + $0x38] sm:$0xff]
  %30 = vst [vmem:[%s5] sm:$0xff] %v22
  %31 = vst [vmem:[%s5 + $0x8] sm:$0xff] %v23
  %32 = vst [vmem:[%s5 + $0x10] sm:$0xff] %v24
  %33 = vst [vmem:[%s5 + $0x18] sm:$0xff] %v25
  %34 = vst [vmem:[%s5 + $0x20] sm:$0xff] %v26
  %35 = vst [vmem:[%s5 + $0x28] sm:$0xff] %v27
  %36 = vst [vmem:[%s5 + $0x30] sm:$0xff] %v28
  %37 = vst [vmem:[%s5 + $0x38] sm:$0xff] %v29
  %vm38 = vcmask 261120
  %v40 = vsel %vm38, %v20, 0
  %v43 = vsel %vm38, %v21, 0
  %45 = vmatprep.subr.mxu0 0.0
  %46 = vmatpush1.msra.mxu0 0.0
  %47 = vmatprep.subr.mxu0 0.0
  %48 = vmatpush1.msra.mxu0 0.0
  %49 = vmatprep.subr.mxu0 0.0
  %50 = vmatpush1.msra.mxu0 0.0
  %51 = vmatprep.subr.mxu0 0.0
  %52 = vmatpush1.msra.mxu0 0.0
  %53 = vmatprep.subr.mxu0 0.0
  %54 = vmatpush1.msra.mxu0 0.0
  %55 = vmatprep.subr.mxu0 0.0
  %56 = vmatpush1.msra.mxu0 0.0
  %57 = vmatprep.subr.mxu0 0.0
  %58 = vmatpush1.msra.mxu0 0.0
  %59 = vmatprep.subr.mxu0 0.0
  %60 = vmatpush1.msra.mxu0 0.0
  %61 = vmatprep.subr.mxu0 0.0
  %62 = vmatpush1.msra.mxu0 0.0
  %63 = vmatprep.subr.mxu0 0.0
  %64 = vmatpush1.msra.mxu0 0.0
  %65 = vmatprep.subr.mxu0 0.0
  %66 = vmatpush1.msra.mxu0 0.0
  %67 = vmatprep.subr.mxu0 0.0
  %68 = vmatpush1.msra.mxu0 0.0
  %69 = vmatprep.subr.mxu0 %v29
  %70 = vmatpush1.msra.mxu0 %v28
  %71 = vmatprep.subr.mxu0 %v27
  %72 = vmatpush1.msra.mxu0 %v26
  %73 = vmatprep.subr.mxu0 %v25
  %74 = vmatpush1.msra.mxu0 %v24
  %75 = vmatprep.subr.mxu0 %v23
  %76 = vmatpush1.msra.mxu0 %v22
  %77 = vmatprep.subr.mxu0 0.0
  %78 = vmatpush2.msra.mxu0 0.0
  %79 = vmatprep.subr.mxu0 0.0
  %80 = vmatpush2.msra.mxu0 0.0
  %81 = vmatprep.subr.mxu0 0.0
  %82 = vmatpush2.msra.mxu0 0.0
  %83 = vmatprep.subr.mxu0 0.0
  %84 = vmatpush2.msra.mxu0 0.0
  %85 = vmatprep.subr.mxu0 0.0
  %86 = vmatpush2.msra.mxu0 0.0
  %87 = vmatprep.subr.mxu0 0.0
  %88 = vmatpush2.msra.mxu0 0.0
  %89 = vmatprep.subr.mxu0 0.0
  %90 = vmatpush2.msra.mxu0 0.0
  %91 = vmatprep.subr.mxu0 0.0
  %92 = vmatpush2.msra.mxu0 0.0
  %93 = vmatprep.subr.mxu0 0.0
  %94 = vmatpush2.msra.mxu0 0.0
  %95 = vmatprep.subr.mxu0 0.0
  %96 = vmatpush2.msra.mxu0 0.0
  %97 = vmatprep.subr.mxu0 0.0
  %98 = vmatpush2.msra.mxu0 0.0
  %99 = vmatprep.subr.mxu0 0.0
  %100 = vmatpush2.msra.mxu0 0.0
  %101 = vmatprep.subr.mxu0 0.0
  %102 = vmatpush2.msra.mxu0 0.0
  %103 = vmatprep.subr.mxu0 0.0
  %104 = vmatpush2.msra.mxu0 0.0
  %105 = vmatprep.subr.mxu0 0.0
  %106 = vmatpush2.msra.mxu0 0.0
  %107 = vmatprep.subr.mxu0 0.0
  %108 = vmatpush2.msra.mxu0 0.0
  %109 = vmatprep.mubr.f32.mxu0 0.0
  %110 = vmatmul.mubr.f32.gmra.mxu0 %v40
  %v111 = vpop.f32.mrf.mxu0
  %v112 = vadd.f32 0.0, %v111
  %v113 = vpop.f32.mrf.mxu0
  %v114 = vadd.f32 0.0, %v113
  %115 = vmatprep.mubr.f32.mxu0 0.0
  %116 = vmatmul.mubr.f32.gmra.mxu0 %v43
  %v117 = vpop.f32.mrf.mxu0
  %v118 = vadd.f32 0.0, %v117
  %v119 = vpop.f32.mrf.mxu0
  %v120 = vadd.f32 0.0, %v119
  %121 = vdwg.mxu0
  %s122 = scalar_lea.vmem %s0, 64
  %v123 = vld [vmem:[%s122] sm:$0xff]
  %v124 = vld [vmem:[%s122 + $0x8] sm:$0xff]
  %v125 = vld [vmem:[%s122 + $0x10] sm:$0xff]
  %v126 = vld [vmem:[%s122 + $0x18] sm:$0xff]
  %v127 = vld [vmem:[%s122 + $0x20] sm:$0xff]
  %v128 = vld [vmem:[%s122 + $0x28] sm:$0xff]
  %v129 = vld [vmem:[%s122 + $0x30] sm:$0xff]
  %v130 = vld [vmem:[%s122 + $0x38] sm:$0xff]
  %s131 = scalar_lea.vmem %s5, 96
  %132 = vst [vmem:[%s131] sm:$0xff] %v123
  %133 = vst [vmem:[%s131 + $0x8] sm:$0xff] %v124
  %134 = vst [vmem:[%s131 + $0x10] sm:$0xff] %v125
  %135 = vst [vmem:[%s131 + $0x18] sm:$0xff] %v126
  %136 = vst [vmem:[%s131 + $0x20] sm:$0xff] %v127
  %137 = vst [vmem:[%s131 + $0x28] sm:$0xff] %v128
  %138 = vst [vmem:[%s131 + $0x30] sm:$0xff] %v129
  %139 = vst [vmem:[%s131 + $0x38] sm:$0xff] %v130
  %140 = vmatprep.subr.mxu0 0.0
  %141 = vmatpush1.msra.mxu0 0.0
  %142 = vmatprep.subr.mxu0 0.0
  %143 = vmatpush1.msra.mxu0 0.0
  %144 = vmatprep.subr.mxu0 0.0
  %145 = vmatpush1.msra.mxu0 0.0
  %146 = vmatprep.subr.mxu0 0.0
  %147 = vmatpush1.msra.mxu0 0.0
  %148 = vmatprep.subr.mxu0 0.0
  %149 = vmatpush1.msra.mxu0 0.0
  %150 = vmatprep.subr.mxu0 0.0
  %151 = vmatpush1.msra.mxu0 0.0
  %152 = vmatprep.subr.mxu0 0.0
  %153 = vmatpush1.msra.mxu0 0.0
  %154 = vmatprep.subr.mxu0 0.0
  %155 = vmatpush1.msra.mxu0 0.0
  %156 = vmatprep.subr.mxu0 0.0
  %157 = vmatpush1.msra.mxu0 0.0
  %158 = vmatprep.subr.mxu0 0.0
  %159 = vmatpush1.msra.mxu0 0.0
  %160 = vmatprep.subr.mxu0 0.0
  %161 = vmatpush1.msra.mxu0 0.0
  %162 = vmatprep.subr.mxu0 0.0
  %163 = vmatpush1.msra.mxu0 0.0
  %164 = vmatprep.subr.mxu0 %v130
  %165 = vmatpush1.msra.mxu0 %v129
  %166 = vmatprep.subr.mxu0 %v128
  %167 = vmatpush1.msra.mxu0 %v127
  %168 = vmatprep.subr.mxu0 %v126
  %169 = vmatpush1.msra.mxu0 %v125
  %170 = vmatprep.subr.mxu0 %v124
  %171 = vmatpush1.msra.mxu0 %v123
  %172 = vmatprep.subr.mxu0 0.0
  %173 = vmatpush2.msra.mxu0 0.0
  %174 = vmatprep.subr.mxu0 0.0
  %175 = vmatpush2.msra.mxu0 0.0
  %176 = vmatprep.subr.mxu0 0.0
  %177 = vmatpush2.msra.mxu0 0.0
  %178 = vmatprep.subr.mxu0 0.0
  %179 = vmatpush2.msra.mxu0 0.0
  %180 = vmatprep.subr.mxu0 0.0
  %181 = vmatpush2.msra.mxu0 0.0
  %182 = vmatprep.subr.mxu0 0.0
  %183 = vmatpush2.msra.mxu0 0.0
  %184 = vmatprep.subr.mxu0 0.0
  %185 = vmatpush2.msra.mxu0 0.0
  %186 = vmatprep.subr.mxu0 0.0
  %187 = vmatpush2.msra.mxu0 0.0
  %188 = vmatprep.subr.mxu0 0.0
  %189 = vmatpush2.msra.mxu0 0.0
  %190 = vmatprep.subr.mxu0 0.0
  %191 = vmatpush2.msra.mxu0 0.0
  %192 = vmatprep.subr.mxu0 0.0
  %193 = vmatpush2.msra.mxu0 0.0
  %194 = vmatprep.subr.mxu0 0.0
  %195 = vmatpush2.msra.mxu0 0.0
  %196 = vmatprep.subr.mxu0 0.0
  %197 = vmatpush2.msra.mxu0 0.0
  %198 = vmatprep.subr.mxu0 0.0
  %199 = vmatpush2.msra.mxu0 0.0
  %200 = vmatprep.subr.mxu0 0.0
  %201 = vmatpush2.msra.mxu0 0.0
  %202 = vmatprep.subr.mxu0 0.0
  %203 = vmatpush2.msra.mxu0 0.0
  %204 = vmatprep.mubr.f32.mxu0 0.0
  %205 = vmatmul.mubr.f32.gmra.mxu0 %v40
  %v206 = vpop.f32.mrf.mxu0
  %v207 = vadd.f32 0.0, %v206
  %v208 = vpop.f32.mrf.mxu0
  %v209 = vadd.f32 0.0, %v208
  %210 = vmatprep.mubr.f32.mxu0 0.0
  %211 = vmatmul.mubr.f32.gmra.mxu0 %v43
  %v212 = vpop.f32.mrf.mxu0
  %v213 = vadd.f32 0.0, %v212
  %v214 = vpop.f32.mrf.mxu0
  %v215 = vadd.f32 0.0, %v214
  %216 = vdwg.mxu0
  %v217 = vld [vmem:[%s2] sm:$0xff]
  %v218 = vld [vmem:[%s2 + $0x8] sm:$0xff]
  %v219 = vld [vmem:[%s2 + $0x10] sm:$0xff]
  %v220 = vld [vmem:[%s2 + $0x18] sm:$0xff]
  %v221 = vld [vmem:[%s2 + $0x20] sm:$0xff]
  %v222 = vld [vmem:[%s2 + $0x28] sm:$0xff]
  %v223 = vld [vmem:[%s2 + $0x30] sm:$0xff]
  %v224 = vld [vmem:[%s2 + $0x38] sm:$0xff]
  %v225 = vld [vmem:[%s2 + $0x40] sm:$0xff]
  %v226 = vld [vmem:[%s2 + $0x48] sm:$0xff]
  %v227 = vld [vmem:[%s2 + $0x50] sm:$0xff]
  %v228 = vld [vmem:[%s2 + $0x58] sm:$0xff]
  %v229 = vld [vmem:[%s2 + $0x60] sm:$0xff]
  %v230 = vld [vmem:[%s2 + $0x68] sm:$0xff]
  %v231 = vld [vmem:[%s2 + $0x70] sm:$0xff]
  %v232 = vld [vmem:[%s2 + $0x78] sm:$0xff]
  %v233 = vld [vmem:[%s2 + $0x80] sm:$0xff]
  %v234 = vld [vmem:[%s2 + $0x88] sm:$0xff]
  %v235 = vld [vmem:[%s2 + $0x90] sm:$0xff]
  %v236 = vld [vmem:[%s2 + $0x98] sm:$0xff]
  %v237 = vld [vmem:[%s2 + $0xa0] sm:$0xff]
  %v238 = vld [vmem:[%s2 + $0xa8] sm:$0xff]
  %v239 = vld [vmem:[%s2 + $0xb0] sm:$0xff]
  %v240 = vld [vmem:[%s2 + $0xb8] sm:$0xff]
  %v241 = vld [vmem:[%s2 + $0xc0] sm:$0xff]
  %v242 = vld [vmem:[%s2 + $0xc8] sm:$0xff]
  %v243 = vld [vmem:[%s2 + $0xd0] sm:$0xff]
  %v244 = vld [vmem:[%s2 + $0xd8] sm:$0xff]
  %v245 = vld [vmem:[%s2 + $0xe0] sm:$0xff]
  %v246 = vld [vmem:[%s2 + $0xe8] sm:$0xff]
  %v247 = vld [vmem:[%s2 + $0xf0] sm:$0xff]
  %v248 = vld [vmem:[%s2 + $0xf8] sm:$0xff]
  %v249 = vld [vmem:[%s4] sm:$0xff]
  %v250 = vld [vmem:[%s4 + $0x8] sm:$0xff]
  %v251 = vld [vmem:[%s4 + $0x10] sm:$0xff]
  %v252 = vld [vmem:[%s4 + $0x18] sm:$0xff]
  %253 = vmatprep.subr.mxu0 0.0
  %254 = vmatpush1.msra.mxu0 %v232
  %255 = vmatprep.subr.mxu0 0.0
  %256 = vmatpush1.msra.mxu0 %v231
  %257 = vmatprep.subr.mxu0 0.0
  %258 = vmatpush1.msra.mxu0 %v230
  %259 = vmatprep.subr.mxu0 0.0
  %260 = vmatpush1.msra.mxu0 %v229
  %261 = vmatprep.subr.mxu0 0.0
  %262 = vmatpush1.msra.mxu0 %v228
  %263 = vmatprep.subr.mxu0 0.0
  %264 = vmatpush1.msra.mxu0 %v227
  %265 = vmatprep.subr.mxu0 0.0
  %266 = vmatpush1.msra.mxu0 %v226
  %267 = vmatprep.subr.mxu0 0.0
  %268 = vmatpush1.msra.mxu0 %v225
  %269 = vmatprep.subr.mxu0 0.0
  %270 = vmatpush1.msra.mxu0 %v224
  %271 = vmatprep.subr.mxu0 0.0
  %272 = vmatpush1.msra.mxu0 %v223
  %273 = vmatprep.subr.mxu0 0.0
  %274 = vmatpush1.msra.mxu0 %v222
  %275 = vmatprep.subr.mxu0 0.0
  %276 = vmatpush1.msra.mxu0 %v221
  %277 = vmatprep.subr.mxu0 0.0
  %278 = vmatpush1.msra.mxu0 %v220
  %279 = vmatprep.subr.mxu0 0.0
  %280 = vmatpush1.msra.mxu0 %v219
  %281 = vmatprep.subr.mxu0 0.0
  %282 = vmatpush1.msra.mxu0 %v218
  %283 = vmatprep.subr.mxu0 0.0
  %284 = vmatpush1.msra.mxu0 %v217
  %285 = vmatprep.subr.mxu0 0.0
  %286 = vmatpush2.msra.mxu0 %v248
  %287 = vmatprep.subr.mxu0 0.0
  %288 = vmatpush2.msra.mxu0 %v247
  %289 = vmatprep.subr.mxu0 0.0
  %290 = vmatpush2.msra.mxu0 %v246
  %291 = vmatprep.subr.mxu0 0.0
  %292 = vmatpush2.msra.mxu0 %v245
  %293 = vmatprep.subr.mxu0 0.0
  %294 = vmatpush2.msra.mxu0 %v244
  %295 = vmatprep.subr.mxu0 0.0
  %296 = vmatpush2.msra.mxu0 %v243
  %297 = vmatprep.subr.mxu0 0.0
  %298 = vmatpush2.msra.mxu0 %v242
  %299 = vmatprep.subr.mxu0 0.0
  %300 = vmatpush2.msra.mxu0 %v241
  %301 = vmatprep.subr.mxu0 0.0
  %302 = vmatpush2.msra.mxu0 %v240
  %303 = vmatprep.subr.mxu0 0.0
  %304 = vmatpush2.msra.mxu0 %v239
  %305 = vmatprep.subr.mxu0 0.0
  %306 = vmatpush2.msra.mxu0 %v238
  %307 = vmatprep.subr.mxu0 0.0
  %308 = vmatpush2.msra.mxu0 %v237
  %309 = vmatprep.subr.mxu0 0.0
  %310 = vmatpush2.msra.mxu0 %v236
  %311 = vmatprep.subr.mxu0 0.0
  %312 = vmatpush2.msra.mxu0 %v235
  %313 = vmatprep.subr.mxu0 0.0
  %314 = vmatpush2.msra.mxu0 %v234
  %315 = vmatprep.subr.mxu0 0.0
  %316 = vmatpush2.msra.mxu0 %v233
  %317 = vmatprep.mubr.f32.mxu0 %v114
  %318 = vmatmul.mubr.f32.gmra.mxu0 %v112
  %v319 = vpop.f32.mrf.mxu0
  %v320 = vadd.f32 %v249, %v319
  %v321 = vpop.f32.mrf.mxu0
  %322 = vmatprep.mubr.f32.mxu0 %v120
  %323 = vmatmul.mubr.f32.gmra.mxu0 %v118
  %v324 = vpop.f32.mrf.mxu0
  %v325 = vadd.f32 %v250, %v324
  %v326 = vpop.f32.mrf.mxu0
  %327 = vmatprep.mubr.f32.mxu0 %v209
  %328 = vmatmul.mubr.f32.gmra.mxu0 %v207
  %v329 = vpop.f32.mrf.mxu0
  %v330 = vadd.f32 %v251, %v329
  %v331 = vpop.f32.mrf.mxu0
  %332 = vmatprep.mubr.f32.mxu0 %v215
  %333 = vmatmul.mubr.f32.gmra.mxu0 %v213
  %v334 = vpop.f32.mrf.mxu0
  %v335 = vadd.f32 %v252, %v334
  %v336 = vpop.f32.mrf.mxu0
  %337 = vdwg.mxu0
  %v338 = vmax.f32 %v320, 0.0
  %v339 = vmax.f32 %v325, 0.0
  %v340 = vmax.f32 %v330, 0.0
  %v341 = vmax.f32 %v335, 0.0
  %v342 = vld [vmem:[%s3] sm:$0xff]
  %v343 = vld [vmem:[%s3 + $0x8] sm:$0xff]
  %v344 = vld [vmem:[%s3 + $0x10] sm:$0xff]
  %v345 = vld [vmem:[%s3 + $0x18] sm:$0xff]
  %v346 = vld [vmem:[%s3 + $0x20] sm:$0xff]
  %v347 = vld [vmem:[%s3 + $0x28] sm:$0xff]
  %v348 = vld [vmem:[%s3 + $0x30] sm:$0xff]
  %v349 = vld [vmem:[%s3 + $0x38] sm:$0xff]
  %v350 = vld [vmem:[%s3 + $0x40] sm:$0xff]
  %v351 = vld [vmem:[%s3 + $0x48] sm:$0xff]
  %v352 = vld [vmem:[%s3 + $0x50] sm:$0xff]
  %v353 = vld [vmem:[%s3 + $0x58] sm:$0xff]
  %v354 = vld [vmem:[%s3 + $0x60] sm:$0xff]
  %v355 = vld [vmem:[%s3 + $0x68] sm:$0xff]
  %v356 = vld [vmem:[%s3 + $0x70] sm:$0xff]
  %v357 = vld [vmem:[%s3 + $0x78] sm:$0xff]
  %v358 = vld [vmem:[%s3 + $0x80] sm:$0xff]
  %v359 = vld [vmem:[%s3 + $0x88] sm:$0xff]
  %v360 = vld [vmem:[%s3 + $0x90] sm:$0xff]
  %v361 = vld [vmem:[%s3 + $0x98] sm:$0xff]
  %v362 = vld [vmem:[%s3 + $0xa0] sm:$0xff]
  %v363 = vld [vmem:[%s3 + $0xa8] sm:$0xff]
  %v364 = vld [vmem:[%s3 + $0xb0] sm:$0xff]
  %v365 = vld [vmem:[%s3 + $0xb8] sm:$0xff]
  %v366 = vld [vmem:[%s3 + $0xc0] sm:$0xff]
  %v367 = vld [vmem:[%s3 + $0xc8] sm:$0xff]
  %v368 = vld [vmem:[%s3 + $0xd0] sm:$0xff]
  %v369 = vld [vmem:[%s3 + $0xd8] sm:$0xff]
  %v370 = vld [vmem:[%s3 + $0xe0] sm:$0xff]
  %v371 = vld [vmem:[%s3 + $0xe8] sm:$0xff]
  %v372 = vld [vmem:[%s3 + $0xf0] sm:$0xff]
  %v373 = vld [vmem:[%s3 + $0xf8] sm:$0xff]
  %374 = vmatprep.subr.mxu0 %v373
  %375 = vmatpush1.msra.mxu0 %v372
  %376 = vmatprep.subr.mxu0 %v371
  %377 = vmatpush1.msra.mxu0 %v370
  %378 = vmatprep.subr.mxu0 %v369
  %379 = vmatpush1.msra.mxu0 %v368
  %380 = vmatprep.subr.mxu0 %v367
  %381 = vmatpush1.msra.mxu0 %v366
  %382 = vmatprep.subr.mxu0 %v365
  %383 = vmatpush1.msra.mxu0 %v364
  %384 = vmatprep.subr.mxu0 %v363
  %385 = vmatpush1.msra.mxu0 %v362
  %386 = vmatprep.subr.mxu0 %v361
  %387 = vmatpush1.msra.mxu0 %v360
  %388 = vmatprep.subr.mxu0 %v359
  %389 = vmatpush1.msra.mxu0 %v358
  %390 = vmatprep.subr.mxu0 %v357
  %391 = vmatpush1.msra.mxu0 %v356
  %392 = vmatprep.subr.mxu0 %v355
  %393 = vmatpush1.msra.mxu0 %v354
  %394 = vmatprep.subr.mxu0 %v353
  %395 = vmatpush1.msra.mxu0 %v352
  %396 = vmatprep.subr.mxu0 %v351
  %397 = vmatpush1.msra.mxu0 %v350
  %398 = vmatprep.subr.mxu0 %v349
  %399 = vmatpush1.msra.mxu0 %v348
  %400 = vmatprep.subr.mxu0 %v347
  %401 = vmatpush1.msra.mxu0 %v346
  %402 = vmatprep.subr.mxu0 %v345
  %403 = vmatpush1.msra.mxu0 %v344
  %404 = vmatprep.subr.mxu0 %v343
  %405 = vmatpush1.msra.mxu0 %v342
  %406 = vmatprep.subr.mxu0 0.0
  %407 = vmatpush2.msra.mxu0 0.0
  %408 = vmatprep.subr.mxu0 0.0
  %409 = vmatpush2.msra.mxu0 0.0
  %410 = vmatprep.subr.mxu0 0.0
  %411 = vmatpush2.msra.mxu0 0.0
  %412 = vmatprep.subr.mxu0 0.0
  %413 = vmatpush2.msra.mxu0 0.0
  %414 = vmatprep.subr.mxu0 0.0
  %415 = vmatpush2.msra.mxu0 0.0
  %416 = vmatprep.subr.mxu0 0.0
  %417 = vmatpush2.msra.mxu0 0.0
  %418 = vmatprep.subr.mxu0 0.0
  %419 = vmatpush2.msra.mxu0 0.0
  %420 = vmatprep.subr.mxu0 0.0
  %421 = vmatpush2.msra.mxu0 0.0
  %422 = vmatprep.subr.mxu0 0.0
  %423 = vmatpush2.msra.mxu0 0.0
  %424 = vmatprep.subr.mxu0 0.0
  %425 = vmatpush2.msra.mxu0 0.0
  %426 = vmatprep.subr.mxu0 0.0
  %427 = vmatpush2.msra.mxu0 0.0
  %428 = vmatprep.subr.mxu0 0.0
  %429 = vmatpush2.msra.mxu0 0.0
  %430 = vmatprep.subr.mxu0 0.0
  %431 = vmatpush2.msra.mxu0 0.0
  %432 = vmatprep.subr.mxu0 0.0
  %433 = vmatpush2.msra.mxu0 0.0
  %434 = vmatprep.subr.mxu0 0.0
  %435 = vmatpush2.msra.mxu0 0.0
  %436 = vmatprep.subr.mxu0 0.0
  %437 = vmatpush2.msra.mxu0 0.0
  %438 = vmatprep.mubr.f32.mxu0 0.0
  %439 = vmatmul.mubr.f32.gmra.mxu0 %v338
  %v440 = vpop.f32.mrf.mxu0
  %v441 = vadd.f32 0.0, %v440
  %v442 = vpop.f32.mrf.mxu0
  %v443 = vadd.f32 0.0, %v442
  %444 = vmatprep.mubr.f32.mxu0 0.0
  %445 = vmatmul.mubr.f32.gmra.mxu0 %v339
  %v446 = vpop.f32.mrf.mxu0
  %v447 = vadd.f32 0.0, %v446
  %v448 = vpop.f32.mrf.mxu0
  %v449 = vadd.f32 0.0, %v448
  %450 = vmatprep.mubr.f32.mxu0 0.0
  %451 = vmatmul.mubr.f32.gmra.mxu0 %v340
  %v452 = vpop.f32.mrf.mxu0
  %v453 = vadd.f32 0.0, %v452
  %v454 = vpop.f32.mrf.mxu0
  %v455 = vadd.f32 0.0, %v454
  %456 = vmatprep.mubr.f32.mxu0 0.0
  %457 = vmatmul.mubr.f32.gmra.mxu0 %v341
  %v458 = vpop.f32.mrf.mxu0
  %v459 = vadd.f32 0.0, %v458
  %v460 = vpop.f32.mrf.mxu0
  %v461 = vadd.f32 0.0, %v460
  %462 = vdwg.mxu0
  %463 = vst [vmem:[%s5 + $0x40] sm:$0xff] %v441
  %464 = vst [vmem:[%s5 + $0x48] sm:$0xff] %v443
  %465 = vst [vmem:[%s5 + $0x50] sm:$0xff] %v447
  %466 = vst [vmem:[%s5 + $0x58] sm:$0xff] %v449
  %467 = vst [vmem:[%s131 + $0x40] sm:$0xff] %v453
  %468 = vst [vmem:[%s131 + $0x48] sm:$0xff] %v455
  %469 = vst [vmem:[%s131 + $0x50] sm:$0xff] %v459
  %470 = vst [vmem:[%s131 + $0x58] sm:$0xff] %v461
  // Predicated region
  $region22: #{ppm_forward.1} parent=0 // pred_check
    _
  $region23: #{ppm_forward.1} parent=0 // pred_check_branch
    %472 = sbr.rel (0) target = $region25
  $region24: #{ppm_forward.1} parent=0 // pred_region
    _
  $region25: #{ppm_forward.1} parent=0 // pred_fallthru
    _
  // Predicated region
  $region26: #{ppm_forward.1} parent=0 // pred_check
    _
  $region27: #{ppm_forward.1} parent=0 // pred_check_branch
    %474 = sbr.rel (0) target = $region29
  $region28: #{ppm_forward.1} parent=0 // pred_region
    _
  $region29: #{ppm_forward.1} parent=0 // pred_fallthru
    _

</llo_original>
